<compile_context>
chip_gen: v5e
topology: v5e:2x2
jax: 0.10.0
libtpu: 0.0.40
codegen_flags: <defaults>
</compile_context>

<pallas_src>
import functools

import jax
import jax.numpy as jnp
from jax.experimental import pallas as pl
from jax.experimental.pallas import tpu as pltpu


def _round_up(x, m):
    return ((x + m - 1) // m) * m


def _ce_kl_kernel(out_ref, cent_ref, labels_ref, ce_ref, kl_ref, *,
                  n_actual, tile_n, tiles_per_core):
    # out_ref:    (TN, C) logits tile, native dtype (f32 / bf16 ...)
    # cent_ref:   (TN, C) centroid probability tile, native dtype
    # labels_ref: (TN, 1) i32 class indices tile
    # ce_ref:     (TN, 1) f32 per-core resident partial CE sums (output block)
    # kl_ref:     (TN, 1) f32 per-core resident partial KL sums (output block)
    core = pl.program_id(0)
    j = pl.program_id(1)

    @pl.when(j == 0)
    def _():
        ce_ref[...] = jnp.zeros_like(ce_ref)
        kl_ref[...] = jnp.zeros_like(kl_ref)

    logits = out_ref[...].astype(jnp.float32)                # upcast in VMEM
    log_cent = jnp.log(cent_ref[...].astype(jnp.float32))

    row_max = jnp.max(logits, axis=1, keepdims=True)
    shifted = logits - row_max
    e = jnp.exp(shifted)
    s = jnp.sum(e, axis=1, keepdims=True)                    # (TN, 1)
    log_s = jnp.log(s)

    tn, cdim = logits.shape
    col_ids = jax.lax.broadcasted_iota(jnp.int32, (tn, cdim), 1)
    onehot = col_ids == labels_ref[...]                      # (TN,1) bcast over C

    # Cross entropy per row: -log_q[i, label_i] = log_s - shifted[i, label_i]
    lbl_shift = jnp.sum(jnp.where(onehot, shifted, 0.0), axis=1, keepdims=True)
    ce_row = log_s - lbl_shift                                # (TN, 1)

    # KL per row:
    #   sum_c q*(log_q - log_cent)
    #     = (1/s) * [ sum_c e*(shifted - log_cent) - s*log_s ]
    t = jnp.sum(e * (shifted - log_cent), axis=1, keepdims=True)
    kl_row = (t - s * log_s) * pl.reciprocal(s, approx=False)

    # Mask rows that are padding of the partial last block or belong to a
    # clamped duplicate block (logical row index >= N).  Select (where), not
    # multiply, so NaN/Inf garbage rows are harmless.
    blk = core * tiles_per_core + j
    row_ids = blk * tile_n + jax.lax.broadcasted_iota(jnp.int32, (tn, 1), 0)
    valid = row_ids < n_actual

    ce_ref[...] += jnp.where(valid, ce_row, 0.0)
    kl_ref[...] += jnp.where(valid, kl_row, 0.0)


def ce_kl_loss(output, target, centroids, *, tile_n=None, num_cores=2,
               vmem_limit_bytes=56 * 1024 * 1024):
    """output: (N, C) logits, target: (N,) int, centroids: (N, C) probs.

    Inputs are streamed in their native dtype (f32 / bf16) and upcast to f32
    inside the kernel.  Returns (cross_entropy_mean, kl_div_batchmean) as f32.
    """
    n, c = output.shape
    out_bytes = jnp.dtype(output.dtype).itemsize
    cent_bytes = jnp.dtype(centroids.dtype).itemsize

    # Sublane multiple: 8 for 4-byte dtypes, 16 for 2-byte (packed sublanes).
    sub = max(8, 32 // min(out_bytes, cent_bytes))

    # Tile cap: one f32 tile-sized temporary is capped at ~4 MiB, so
    # double-buffered inputs (2 bufs x 2 arrays) plus the ~4 live f32
    # temporaries in the body stay comfortably under vmem_limit_bytes on
    # v5e/v6e (128 MiB physical) and v7x (64 MiB physical per TC).
    tile_budget_elems = (4 * 1024 * 1024) // 4               # tn * C elements
    max_tn = max(sub, (tile_budget_elems // c) // sub * sub)
    if tile_n is None:
        tn = max_tn
    else:
        tn = max(sub, min(_round_up(tile_n, sub), max_tn))
    tn = min(tn, _round_up(n, sub))

    num_tiles = pl.cdiv(n, tn)
    nc = min(num_cores, num_tiles)          # parallel axis (v7x megacore)
    tpc = pl.cdiv(num_tiles, nc)            # tiles per core (excess -> masked)

    lab = target.astype(jnp.int32).reshape(n, 1)

    kernel = functools.partial(_ce_kl_kernel, n_actual=n, tile_n=tn,
                               tiles_per_core=tpc)

    def in_map(core, j):
        # Clamp the DMA source block for the (fully masked) excess steps of
        # the last core; the mask uses the *unclamped* logical block index.
        return (jnp.minimum(core * tpc + j, num_tiles - 1), 0)

    ce_part, kl_part = pl.pallas_call(
        kernel,
        out_shape=(jax.ShapeDtypeStruct((nc * tn, 1), jnp.float32),
                   jax.ShapeDtypeStruct((nc * tn, 1), jnp.float32)),
        grid=(nc, tpc),
        in_specs=[
            pl.BlockSpec((tn, c), in_map),   # logits tile (native dtype)
            pl.BlockSpec((tn, c), in_map),   # centroids tile (native dtype)
            pl.BlockSpec((tn, 1), in_map),   # labels tile
        ],
        out_specs=(
            pl.BlockSpec((tn, 1), lambda core, j: (core, 0)),
            pl.BlockSpec((tn, 1), lambda core, j: (core, 0)),
        ),
        compiler_params=pltpu.CompilerParams(
            dimension_semantics=("parallel", "arbitrary"),
            vmem_limit_bytes=vmem_limit_bytes),
    )(output, centroids, lab)

    inv_n = jnp.float32(1.0 / n)
    return jnp.sum(ce_part) * inv_n, jnp.sum(kl_part) * inv_n


def _reference(output, target, centroids):
    out = output.astype(jnp.float32)
    n = out.shape[0]
    log_q = jax.nn.log_softmax(out, axis=1)
    ce = -jnp.mean(
        jnp.take_along_axis(log_q, target[:, None].astype(jnp.int32), axis=1))
    q = jnp.exp(log_q)
    kl = jnp.sum(q * (log_q - jnp.log(centroids.astype(jnp.float32)))) / n
    return ce, kl


if __name__ == "__main__":
    N, C = 40, 128   # small but lane-aligned; N chosen non-divisible by tiles

    key = jax.random.PRNGKey(0)
    k_out, k_lab, k_cent = jax.random.split(key, 3)

    output = jax.random.normal(k_out, (N, C), dtype=jnp.float32)
    target = jax.random.randint(k_lab, (N,), 0, C, dtype=jnp.int32)
    centroids = jax.nn.softmax(
        jax.random.normal(k_cent, (N, C), dtype=jnp.float32), axis=1)

    ce_ref_v, kl_ref_v = jax.block_until_ready(
        _reference(output, target, centroids))

    # 1) small explicit tile -> 3 real blocks (last one partial), 2-way core
    #    split with a fully-masked clamped duplicate block on core 1.
    ce, kl = jax.block_until_ready(
        ce_kl_loss(output, target, centroids, tile_n=16))
    assert jnp.allclose(ce, ce_ref_v, rtol=1e-5, atol=1e-5), (ce, ce_ref_v)
    assert jnp.allclose(kl, kl_ref_v, rtol=1e-5, atol=1e-5), (kl, kl_ref_v)

    # 2) auto tile size (single large block here).
    ce2, kl2 = jax.block_until_ready(ce_kl_loss(output, target, centroids))
    assert jnp.allclose(ce2, ce_ref_v, rtol=1e-5, atol=1e-5), (ce2, ce_ref_v)
    assert jnp.allclose(kl2, kl_ref_v, rtol=1e-5, atol=1e-5), (kl2, kl_ref_v)

    # 3) native bf16 streaming path (no wrapper-side upcast copy).
    out_bf = output.astype(jnp.bfloat16)
    cent_bf = centroids.astype(jnp.bfloat16)
    ce_ref_b, kl_ref_b = jax.block_until_ready(
        _reference(out_bf, target, cent_bf))
    ce3, kl3 = jax.block_until_ready(
        ce_kl_loss(out_bf, target, cent_bf, tile_n=16))
    assert jnp.allclose(ce3, ce_ref_b, rtol=1e-4, atol=1e-4), (ce3, ce_ref_b)
    assert jnp.allclose(kl3, kl_ref_b, rtol=1e-4, atol=1e-4), (kl3, kl_ref_b)

    print("KERNEL_OK")
</pallas_src>

<mosaic_0001>
module attributes {stable_mosaic.version = 11 : i64} {
  func.func @_ce_kl_kernel(%arg0: i32, %arg1: i32, %arg2: memref<16x128xf32, #tpu.memory_space<vmem>>, %arg3: memref<16x128xf32, #tpu.memory_space<vmem>>, %arg4: memref<16x1xi32, #tpu.memory_space<vmem>>, %arg5: memref<16x1xf32, #tpu.memory_space<vmem>>, %arg6: memref<16x1xf32, #tpu.memory_space<vmem>>) attributes {dimension_semantics = [#tpu.dimension_semantics<parallel>, #tpu.dimension_semantics<arbitrary>], iteration_bounds = array<i64: 2, 2>, scalar_prefetch = 0 : i64, scratch_operands = 0 : i64, tpu.core_type = #tpu.core_type<tc>, window_params = [{transform_indices = @transform_0, window_bounds = array<i64: 16, 128>}, {transform_indices = @transform_1, window_bounds = array<i64: 16, 128>}, {transform_indices = @transform_2, window_bounds = array<i64: 16, 1>}, {transform_indices = @transform_3, window_bounds = array<i64: 16, 1>}, {transform_indices = @transform_4, window_bounds = array<i64: 16, 1>}]} {
    %c0_i32 = arith.constant 0 : i32
    %0 = arith.cmpi eq, %arg1, %c0_i32 : i32
    %1 = arith.extui %0 : i1 to i32
    %c0_i32_0 = arith.constant 0 : i32
    %2 = arith.cmpi ne, %1, %c0_i32_0 : i32
    scf.if %2 {
      %cst_20 = arith.constant 0.000000e+00 : f32
      %49 = vector.broadcast %cst_20 : f32 to vector<16x1xf32>
      %c0_21 = arith.constant 0 : index
      %c0_22 = arith.constant 0 : index
      %50 = vector.load %arg5[%c0_21, %c0_22] : memref<16x1xf32, #tpu.memory_space<vmem>>, vector<16x1xf32>
      tpu.vector_store %arg5[%c0_21, %c0_22], %49 {strides = array<i32>} : memref<16x1xf32, #tpu.memory_space<vmem>>, vector<16x1xf32>,
      %cst_23 = arith.constant 0.000000e+00 : f32
      %51 = vector.broadcast %cst_23 : f32 to vector<16x1xf32>
      %c0_24 = arith.constant 0 : index
      %c0_25 = arith.constant 0 : index
      %52 = vector.load %arg6[%c0_24, %c0_25] : memref<16x1xf32, #tpu.memory_space<vmem>>, vector<16x1xf32>
      tpu.vector_store %arg6[%c0_24, %c0_25], %51 {strides = array<i32>} : memref<16x1xf32, #tpu.memory_space<vmem>>, vector<16x1xf32>,
    } else {
    }
    %c0 = arith.constant 0 : index
    %c0_1 = arith.constant 0 : index
    %3 = vector.load %arg2[%c0, %c0_1] : memref<16x128xf32, #tpu.memory_space<vmem>>, vector<16x128xf32>
    %c0_2 = arith.constant 0 : index
    %c0_3 = arith.constant 0 : index
    %4 = vector.load %arg3[%c0_2, %c0_3] : memref<16x128xf32, #tpu.memory_space<vmem>>, vector<16x128xf32>
    %5 = math.log %4 : vector<16x128xf32>
    %cst = arith.constant dense<0xFF800000> : vector<16xf32>
    %6 = vector.multi_reduction <maximumf>, %3, %cst [1] : vector<16x128xf32> to vector<16xf32>
    %7 = vector.shape_cast %6 : vector<16xf32> to vector<16x1xf32>
    %8 = vector.broadcast %7 : vector<16x1xf32> to vector<16x128xf32>
    %9 = arith.subf %3, %8 : vector<16x128xf32>
    %10 = math.exp %9 : vector<16x128xf32>
    %cst_4 = arith.constant dense<0.000000e+00> : vector<16xf32>
    %11 = vector.multi_reduction <add>, %10, %cst_4 [1] : vector<16x128xf32> to vector<16xf32>
    %12 = vector.shape_cast %11 : vector<16xf32> to vector<16x1xf32>
    %13 = math.log %12 : vector<16x1xf32>
    %14 = tpu.iota {dimensions = array<i32: 1>} : vector<16x128xi32>
    %c0_5 = arith.constant 0 : index
    %c0_6 = arith.constant 0 : index
    %15 = vector.load %arg4[%c0_5, %c0_6] : memref<16x1xi32, #tpu.memory_space<vmem>>, vector<16x1xi32>
    %16 = vector.broadcast %15 : vector<16x1xi32> to vector<16x128xi32>
    %17 = arith.cmpi eq, %14, %16 : vector<16x128xi32>
    %cst_7 = arith.constant 0.000000e+00 : f32
    %18 = vector.broadcast %cst_7 : f32 to vector<16x128xf32>
    %19 = arith.select %17, %9, %18 : vector<16x128xi1>, vector<16x128xf32>
    %cst_8 = arith.constant dense<0.000000e+00> : vector<16xf32>
    %20 = vector.multi_reduction <add>, %19, %cst_8 [1] : vector<16x128xf32> to vector<16xf32>
    %21 = vector.shape_cast %20 : vector<16xf32> to vector<16x1xf32>
    %22 = arith.subf %13, %21 : vector<16x1xf32>
    %23 = arith.subf %9, %5 : vector<16x128xf32>
    %24 = arith.mulf %10, %23 : vector<16x128xf32>
    %cst_9 = arith.constant dense<0.000000e+00> : vector<16xf32>
    %25 = vector.multi_reduction <add>, %24, %cst_9 [1] : vector<16x128xf32> to vector<16xf32>
    %26 = vector.shape_cast %25 : vector<16xf32> to vector<16x1xf32>
    %27 = arith.mulf %12, %13 : vector<16x1xf32>
    %28 = arith.subf %26, %27 : vector<16x1xf32>
    %29 = tpu.reciprocal %12 : vector<16x1xf32> -> vector<16x1xf32>
    %30 = arith.mulf %28, %29 : vector<16x1xf32>
    %c2_i32 = arith.constant 2 : i32
    %31 = arith.muli %arg0, %c2_i32 : i32
    %32 = arith.addi %31, %arg1 : i32
    %c16_i32 = arith.constant 16 : i32
    %33 = arith.muli %32, %c16_i32 : i32
    %34 = tpu.iota {dimensions = array<i32: 0>} : vector<16x1xi32>
    %35 = vector.broadcast %33 : i32 to vector<16x1xi32>
    %36 = arith.addi %35, %34 : vector<16x1xi32>
    %c40_i32 = arith.constant 40 : i32
    %37 = vector.broadcast %c40_i32 : i32 to vector<16x1xi32>
    %38 = arith.cmpi slt, %36, %37 : vector<16x1xi32>
    %c0_10 = arith.constant 0 : index
    %c0_11 = arith.constant 0 : index
    %39 = vector.load %arg5[%c0_10, %c0_11] : memref<16x1xf32, #tpu.memory_space<vmem>>, vector<16x1xf32>
    %cst_12 = arith.constant 0.000000e+00 : f32
    %40 = vector.broadcast %cst_12 : f32 to vector<16x1xf32>
    %41 = arith.select %38, %22, %40 : vector<16x1xi1>, vector<16x1xf32>
    %42 = arith.addf %39, %41 : vector<16x1xf32>
    %c0_13 = arith.constant 0 : index
    %c0_14 = arith.constant 0 : index
    %43 = vector.load %arg5[%c0_13, %c0_14] : memref<16x1xf32, #tpu.memory_space<vmem>>, vector<16x1xf32>
    tpu.vector_store %arg5[%c0_13, %c0_14], %42 {strides = array<i32>} : memref<16x1xf32, #tpu.memory_space<vmem>>, vector<16x1xf32>,
    %c0_15 = arith.constant 0 : index
    %c0_16 = arith.constant 0 : index
    %44 = vector.load %arg6[%c0_15, %c0_16] : memref<16x1xf32, #tpu.memory_space<vmem>>, vector<16x1xf32>
    %cst_17 = arith.constant 0.000000e+00 : f32
    %45 = vector.broadcast %cst_17 : f32 to vector<16x1xf32>
    %46 = arith.select %38, %30, %45 : vector<16x1xi1>, vector<16x1xf32>
    %47 = arith.addf %44, %46 : vector<16x1xf32>
    %c0_18 = arith.constant 0 : index
    %c0_19 = arith.constant 0 : index
    %48 = vector.load %arg6[%c0_18, %c0_19] : memref<16x1xf32, #tpu.memory_space<vmem>>, vector<16x1xf32>
    tpu.vector_store %arg6[%c0_18, %c0_19], %47 {strides = array<i32>} : memref<16x1xf32, #tpu.memory_space<vmem>>, vector<16x1xf32>,
    return
  }
  func.func @transform_0(%arg0: i32, %arg1: i32) -> (i32, i32) {
    %c2_i32 = arith.constant 2 : i32
    %0 = arith.muli %arg0, %c2_i32 : i32
    %1 = arith.addi %0, %arg1 : i32
    %c2_i32_0 = arith.constant 2 : i32
    %2 = arith.minsi %1, %c2_i32_0 : i32
    %c0_i32 = arith.constant 0 : i32
    %c0_i32_1 = arith.constant 0 : i32
    return %2, %c0_i32 : i32, i32
  }
  func.func @transform_1(%arg0: i32, %arg1: i32) -> (i32, i32) {
    %c2_i32 = arith.constant 2 : i32
    %0 = arith.muli %arg0, %c2_i32 : i32
    %1 = arith.addi %0, %arg1 : i32
    %c2_i32_0 = arith.constant 2 : i32
    %2 = arith.minsi %1, %c2_i32_0 : i32
    %c0_i32 = arith.constant 0 : i32
    %c0_i32_1 = arith.constant 0 : i32
    return %2, %c0_i32 : i32, i32
  }
  func.func @transform_2(%arg0: i32, %arg1: i32) -> (i32, i32) {
    %c2_i32 = arith.constant 2 : i32
    %0 = arith.muli %arg0, %c2_i32 : i32
    %1 = arith.addi %0, %arg1 : i32
    %c2_i32_0 = arith.constant 2 : i32
    %2 = arith.minsi %1, %c2_i32_0 : i32
    %c0_i32 = arith.constant 0 : i32
    %c0_i32_1 = arith.constant 0 : i32
    return %2, %c0_i32 : i32, i32
  }
  func.func @transform_3(%arg0: i32, %arg1: i32) -> (i32, i32) {
    %c0_i32 = arith.constant 0 : i32
    %c0_i32_0 = arith.constant 0 : i32
    return %arg0, %c0_i32 : i32, i32
  }
  func.func @transform_4(%arg0: i32, %arg1: i32) -> (i32, i32) {
    %c0_i32 = arith.constant 0 : i32
    %c0_i32_0 = arith.constant 0 : i32
    return %arg0, %c0_i32 : i32, i32
  }
}

</mosaic_0001>

<llo_original>
// kernel: tpu_custom_call.1
$region0: #{tpu_custom_call.1}
  #allocation0 [shape = 'u32[]', space=smem, size = 0x4, offset = 0x4, fixed_abs, tag = 'smem constant byte address 0x4 - core index']
  #allocation1 [shape = 'u32[72,128]{1,0:T(1,128)}', space=vmem, size = 0x9000, scoped, tag = 'internal scratch']
  %s0 = inlined_call_operand.vmem [shape: f32[40,128], index: 0, kind: input, shape index: {}]
  %s1 = inlined_call_operand.hbm [shape: f32[40,128], index: 1, kind: input, shape index: {}]
  %s2 = inlined_call_operand.vmem [shape: s32[40,1], index: 2, kind: input, shape index: {}]
  %s3 = inlined_call_operand.vmem [shape: f32[32,1], index: 3, kind: output, shape index: {0}]
  %s4 = inlined_call_operand.vmem [shape: f32[32,1], index: 4, kind: output, shape index: {1}]
  %5 = xla_tuple %s3, %s4
  %s6 = sld [smem:[#allocation0]]
  $region61: #{tpu_custom_call.1} parent=0
    _
  %s8 = ssub.s32 1, %s6
  %s9 = scalar_select 0, %s8, %s6
  $region1: #{tpu_custom_call.1} parent=0
    #allocation2 [shape = 'u8[16384]{0}', space=vmem, size = 0x4000, scoped, tag = 'input window, operand 1']
    #allocation3 [shape = 's32[2]{0}', space=sflag, size = 0x8, scoped, tag = 'scoped memory for tpu_custom_call.1']
    %10 = vsyncpa [#allocation3], 0
    %s11 = scalar_lea.sflag [#allocation3], 1
    %12 = vsyncpa %s11, 0
    loop: start=0, step=1, limit=6
    $region2: #{tpu_custom_call.1} parent=1 // loop_pre_header
      _
    $region3: #{tpu_custom_call.1} parent=1 // loop_header
      %s14 = sphi 0, %s18
      %p15 = scmp.ge.s32.totalorder %s14, 6
      %s21 = sphi 0, %s33
      %s22 = sphi 0, %s29
      %s23 = sphi 0, %s21
      %s24 = sphi 0, %s22
      %s25 = sphi 0, %s23
      %s26 = sphi 0, %s24
      %s44 = sphi 0, %s46
      %s47 = sphi 0, %s44
      %s48 = sphi 0, %s47
      %s64 = sphi 0, %s48
      %s78 = sphi 0, %s80
      %s81 = sphi 0, %s78
      %s82 = sphi 0, %s81
      %s98 = sphi 0, %s82
      %s112 = sphi 0, %s114
      %s115 = sphi 0, %s112
      %s116 = sphi 0, %s115
      %s132 = sphi 0, %s116
      %s138 = sphi 0, %s140
      %s141 = sphi 0, %s138
      %s142 = sphi 0, %s141
      %s158 = sphi 0, %s142
      %s164 = sphi 0, %s166
      %s167 = sphi 0, %s164
      %s168 = sphi 0, %s167
      %s184 = sphi 0, %s168
    $region4: #{tpu_custom_call.1} parent=1 // loop_header_branch
      %17 = sbr.rel (%p15) target = $region8
    $region5: #{tpu_custom_call.1} parent=1 // loop_body
      %s19 = ssub.s32 %s14, 1
      %s20 = ssub.s32 %s14, 2
      %s27 = sadd.s32 1, %s22
      %p28 = scmp.ge.s32.totalorder %s27, 2
      %s29 = scalar_select %p28, 0, %s27
      %s30 = sadd.s32 1, %s21
      %s31 = scalar_select %p28, %s30, %s21
      %p32 = scmp.ge.s32.totalorder %s31, 2
      %s33 = scalar_select %p32, 0, %s31
      %s34 = smul.u32 %s21, 2
      %s35 = sadd.s32 %s34, %s22
      %p36 = scmp.lt.s32.totalorder %s35, 2
      %s37 = scalar_select %p36, %s35, 2
      %s38 = smul.u32 %s33, 2
      %s39 = sadd.s32 %s38, %s29
      %p40 = scmp.lt.s32.totalorder %s39, 2
      %s41 = scalar_select %p40, %s39, 2
      %s42 = ssub.s32 %s37, %s41
      %p43 = scmp.eq.s32.totalorder %s42, 0
      %s45 = sadd.s32 %s44, 1
      %s46 = scalar_select %p43, %s44, %s45
      %p49 = pneg %p43
      %p50 = scmp.eq.s32.totalorder %s14, 3
      %p51 = por %p49, %p50
      %p52 = scmp.ne.s32.totalorder %s44, %s47
      %p53 = scmp.eq.s32.totalorder %s14, 0
      %p54 = por %p52, %p53
      %p55 = scmp.ne.s32.totalorder %s44, %s47
      %p56 = scmp.eq.s32.totalorder %s19, 3
      %p57 = por %p55, %p56
      %p58 = scmp.ne.s32.totalorder %s47, %s48
      %p59 = scmp.eq.s32.totalorder %s19, 0
      %p60 = por %p58, %p59
      %p61 = scmp.ne.s32.totalorder %s47, %s48
      %p62 = scmp.eq.s32.totalorder %s20, 3
      %p63 = por %p61, %p62
      %p65 = scmp.ne.s32.totalorder %s48, %s64
      %p66 = scmp.eq.s32.totalorder %s20, 0
      %p67 = por %p65, %p66
      %s68 = smul.u32 %s21, 2
      %s69 = sadd.s32 %s68, %s22
      %p70 = scmp.lt.s32.totalorder %s69, 2
      %s71 = scalar_select %p70, %s69, 2
      %s72 = smul.u32 %s33, 2
      %s73 = sadd.s32 %s72, %s29
      %p74 = scmp.lt.s32.totalorder %s73, 2
      %s75 = scalar_select %p74, %s73, 2
      %s76 = ssub.s32 %s71, %s75
      %p77 = scmp.eq.s32.totalorder %s76, 0
      %s79 = sadd.s32 %s78, 1
      %s80 = scalar_select %p77, %s78, %s79
      %p83 = pneg %p77
      %p84 = scmp.eq.s32.totalorder %s14, 3
      %p85 = por %p83, %p84
      %p86 = scmp.ne.s32.totalorder %s78, %s81
      %p87 = scmp.eq.s32.totalorder %s14, 0
      %p88 = por %p86, %p87
      %p89 = scmp.ne.s32.totalorder %s78, %s81
      %p90 = scmp.eq.s32.totalorder %s19, 3
      %p91 = por %p89, %p90
      %p92 = scmp.ne.s32.totalorder %s81, %s82
      %p93 = scmp.eq.s32.totalorder %s19, 0
      %p94 = por %p92, %p93
      %p95 = scmp.ne.s32.totalorder %s81, %s82
      %p96 = scmp.eq.s32.totalorder %s20, 3
      %p97 = por %p95, %p96
      %p99 = scmp.ne.s32.totalorder %s82, %s98
      %p100 = scmp.eq.s32.totalorder %s20, 0
      %p101 = por %p99, %p100
      %s102 = smul.u32 %s21, 2
      %s103 = sadd.s32 %s102, %s22
      %p104 = scmp.lt.s32.totalorder %s103, 2
      %s105 = scalar_select %p104, %s103, 2
      %s106 = smul.u32 %s33, 2
      %s107 = sadd.s32 %s106, %s29
      %p108 = scmp.lt.s32.totalorder %s107, 2
      %s109 = scalar_select %p108, %s107, 2
      %s110 = ssub.s32 %s105, %s109
      %p111 = scmp.eq.s32.totalorder %s110, 0
      %s113 = sadd.s32 %s112, 1
      %s114 = scalar_select %p111, %s112, %s113
      %p117 = pneg %p111
      %p118 = scmp.eq.s32.totalorder %s14, 3
      %p119 = por %p117, %p118
      %p120 = scmp.ne.s32.totalorder %s112, %s115
      %p121 = scmp.eq.s32.totalorder %s14, 0
      %p122 = por %p120, %p121
      %p123 = scmp.ne.s32.totalorder %s112, %s115
      %p124 = scmp.eq.s32.totalorder %s19, 3
      %p125 = por %p123, %p124
      %p126 = scmp.ne.s32.totalorder %s115, %s116
      %p127 = scmp.eq.s32.totalorder %s19, 0
      %p128 = por %p126, %p127
      %p129 = scmp.ne.s32.totalorder %s115, %s116
      %p130 = scmp.eq.s32.totalorder %s20, 3
      %p131 = por %p129, %p130
      %p133 = scmp.ne.s32.totalorder %s116, %s132
      %p134 = scmp.eq.s32.totalorder %s20, 0
      %p135 = por %p133, %p134
      %s136 = ssub.s32 %s21, %s33
      %p137 = scmp.eq.s32.totalorder %s136, 0
      %s139 = sadd.s32 %s138, 1
      %s140 = scalar_select %p137, %s138, %s139
      %p143 = pneg %p137
      %p144 = scmp.eq.s32.totalorder %s14, 3
      %p145 = por %p143, %p144
      %p146 = scmp.ne.s32.totalorder %s138, %s141
      %p147 = scmp.eq.s32.totalorder %s14, 0
      %p148 = por %p146, %p147
      %p149 = scmp.ne.s32.totalorder %s138, %s141
      %p150 = scmp.eq.s32.totalorder %s19, 3
      %p151 = por %p149, %p150
      %p152 = scmp.ne.s32.totalorder %s141, %s142
      %p153 = scmp.eq.s32.totalorder %s19, 0
      %p154 = por %p152, %p153
      %p155 = scmp.ne.s32.totalorder %s141, %s142
      %p156 = scmp.eq.s32.totalorder %s20, 3
      %p157 = por %p155, %p156
      %p159 = scmp.ne.s32.totalorder %s142, %s158
      %p160 = scmp.eq.s32.totalorder %s20, 0
      %p161 = por %p159, %p160
      %s162 = ssub.s32 %s21, %s33
      %p163 = scmp.eq.s32.totalorder %s162, 0
      %s165 = sadd.s32 %s164, 1
      %s166 = scalar_select %p163, %s164, %s165
      %p169 = pneg %p163
      %p170 = scmp.eq.s32.totalorder %s14, 3
      %p171 = por %p169, %p170
      %p172 = scmp.ne.s32.totalorder %s164, %s167
      %p173 = scmp.eq.s32.totalorder %s14, 0
      %p174 = por %p172, %p173
      %p175 = scmp.ne.s32.totalorder %s164, %s167
      %p176 = scmp.eq.s32.totalorder %s19, 3
      %p177 = por %p175, %p176
      %p178 = scmp.ne.s32.totalorder %s167, %s168
      %p179 = scmp.eq.s32.totalorder %s19, 0
      %p180 = por %p178, %p179
      %p181 = scmp.ne.s32.totalorder %s167, %s168
      %p182 = scmp.eq.s32.totalorder %s20, 3
      %p183 = por %p181, %p182
      %p185 = scmp.ne.s32.totalorder %s168, %s184
      %p186 = scmp.eq.s32.totalorder %s20, 0
      %p187 = por %p185, %p186
      %p188 = scmp.le.s32.totalorder 1, %s14
      %p189 = scmp.lt.s32.totalorder %s14, 5
      %p190 = pnand %p188, %p189
      %p191 = pneg %p190
      // Predicated region
      $region9: #{tpu_custom_call.1} parent=5 // pred_check
        _
      $region10: #{tpu_custom_call.1} parent=5 // pred_check_branch
        %193 = sbr.rel (%p190) target = $region12
      $region11: #{tpu_custom_call.1} parent=5 // pred_region
        %s194 = ssub.s32 %s14, 1
      $region12: #{tpu_custom_call.1} parent=5 // pred_fallthru
        _
      %p195 = scmp.lt.s32.totalorder %s14, 4
      // Predicated region
      $region13: #{tpu_custom_call.1} parent=5 // pred_check
        %p196 = pneg %p195
      $region14: #{tpu_custom_call.1} parent=5 // pred_check_branch
        %198 = sbr.rel (%p196) target = $region16
      $region15: #{tpu_custom_call.1} parent=5 // pred_region
        // Predicated region
        $region17: #{tpu_custom_call.1} parent=15 // pred_check
          %p199 = pneg %p54
        $region18: #{tpu_custom_call.1} parent=15 // pred_check_branch
          %201 = sbr.rel (%p199) target = $region20
        $region19: #{tpu_custom_call.1} parent=15 // pred_region
          %s202 = smul.u32 %s21, 2
          %s203 = sadd.s32 %s202, %s22
          %p204 = scmp.lt.s32.totalorder %s203, 2
          %s205 = scalar_select %p204, %s203, 2
          %s206 = smul.u32 2, %s205
          %s207 = ssub.s32 5, %s206
          %p208 = scmp.lt.s32.totalorder %s207, 2
          %s209 = scalar_select %p208, %s207, 2
          %s210 = smul.u32 8, %s209
          %p211 = scmp.lt.s32.totalorder %s206, 4
          %s212 = scalar_select %p211, %s206, 4
          %s213 = smul.addr %s212, 8
          %s214 = scalar_lea.vmem %s0, %s213
          %s215 = smul.u32 %s21, 2
          %s216 = sadd.s32 %s215, %s22
          %p217 = scmp.lt.s32.totalorder %s216, 2
          %s218 = scalar_select %p217, %s216, 2
          %s219 = smul.u32 2, %s218
          %s220 = ssub.s32 5, %s219
          %p221 = scmp.lt.s32.totalorder %s220, 2
          %s222 = scalar_select %p221, %s220, 2
          %s223 = smul.u32 8, %s222
        $region20: #{tpu_custom_call.1} parent=15 // pred_fallthru
          _
        // Predicated region
        $region21: #{tpu_custom_call.1} parent=15 // pred_check
          %p224 = pneg %p88
        $region22: #{tpu_custom_call.1} parent=15 // pred_check_branch
          %226 = sbr.rel (%p224) target = $region24
        $region23: #{tpu_custom_call.1} parent=15 // pred_region
          %s227 = sand.u32 %s78, 1
          %s228 = scalar_lea.sflag [#allocation3], %s227
          %s229 = sand.u32 %s78, 1
          %s230 = smul.addr %s229, 16
          %s231 = scalar_lea.vmem [#allocation2], %s230
          %s232 = smul.u32 %s21, 2
          %s233 = sadd.s32 %s232, %s22
          %p234 = scmp.lt.s32.totalorder %s233, 2
          %s235 = scalar_select %p234, %s233, 2
          %s236 = smul.u32 2, %s235
          %s237 = ssub.s32 5, %s236
          %p238 = scmp.lt.s32.totalorder %s237, 2
          %s239 = scalar_select %p238, %s237, 2
          %s240 = smul.u32 8, %s239
          %s241 = ssub.s32 16, %s240
          %s242 = sshll.u32 %s241, 4
          %243 = vsyncadd %s228, %s242
          %p244 = scmp.ne.s32.totalorder 0, %s240
          %s245 = smul.addr %s236, 8
          %s246 = scalar_lea.hbm %s1, %s245
          %s247 = smul.u32 8, %s239
          %s248 = sshll.u32 %s246, 4
          %s249 = int_to_ptr.hbm [resolvable:$true] %s248
          %s250 = sshll.u32 %s231, 4
          %s251 = int_to_ptr.vmem [resolvable:$true] %s250
          %s252 = sshll.u32 %s247, 4
          %256 = dma.hbm_to_vmem [thread:$0]  (%p244), %s249, %s252, %s251, %s228, 128, 128, 8
        $region24: #{tpu_custom_call.1} parent=15 // pred_fallthru
          _
        // Predicated region
        $region25: #{tpu_custom_call.1} parent=15 // pred_check
          %p257 = pneg %p122
        $region26: #{tpu_custom_call.1} parent=15 // pred_check_branch
          %259 = sbr.rel (%p257) target = $region28
        $region27: #{tpu_custom_call.1} parent=15 // pred_region
          %s260 = smul.u32 %s21, 2
          %s261 = sadd.s32 %s260, %s22
          %p262 = scmp.lt.s32.totalorder %s261, 2
          %s263 = scalar_select %p262, %s261, 2
          %s264 = smul.u32 2, %s263
          %s265 = ssub.s32 5, %s264
          %p266 = scmp.lt.s32.totalorder %s265, 2
          %s267 = scalar_select %p266, %s265, 2
          %s268 = smul.u32 8, %s267
          %p269 = scmp.lt.s32.totalorder %s264, 4
          %s270 = scalar_select %p269, %s264, 4
          %s271 = smul.addr %s270, 8
          %s272 = scalar_lea.vmem %s2, %s271
          %s273 = smul.u32 %s21, 2
          %s274 = sadd.s32 %s273, %s22
          %p275 = scmp.lt.s32.totalorder %s274, 2
          %s276 = scalar_select %p275, %s274, 2
          %s277 = smul.u32 2, %s276
          %s278 = ssub.s32 5, %s277
          %p279 = scmp.lt.s32.totalorder %s278, 2
          %s280 = scalar_select %p279, %s278, 2
          %s281 = smul.u32 8, %s280
        $region28: #{tpu_custom_call.1} parent=15 // pred_fallthru
          _
      $region16: #{tpu_custom_call.1} parent=5 // pred_fallthru
        _
      %p282 = scmp.le.s32.totalorder 1, %s14
      %p283 = scmp.lt.s32.totalorder %s14, 5
      %p284 = pnand %p282, %p283
      %p285 = pneg %p284
      // Predicated region
      $region29: #{tpu_custom_call.1} parent=5 // pred_check
        _
      $region30: #{tpu_custom_call.1} parent=5 // pred_check_branch
        %287 = sbr.rel (%p284) target = $region32
      $region31: #{tpu_custom_call.1} parent=5 // pred_region
        %s288 = ssub.s32 %s14, 1
        %s289 = sand.u32 %s81, 1
        %s290 = scalar_lea.sflag [#allocation3], %s289
        %s291 = sand.u32 %s81, 1
        %s292 = smul.addr %s291, 16
        %s293 = scalar_lea.vmem [#allocation2], %s292
        // Predicated region
        $region33: #{tpu_custom_call.1} parent=31 // pred_check
          %p294 = pneg %p94
        $region34: #{tpu_custom_call.1} parent=31 // pred_check_branch
          %296 = sbr.rel (%p294) target = $region36
        $region35: #{tpu_custom_call.1} parent=31 // pred_region
          %298 = dma.done %s290, 256
        $region36: #{tpu_custom_call.1} parent=31 // pred_fallthru
          _
        %s299 = smul.u32 %s23, 2
        %s300 = sadd.s32 %s299, %s24
        %p301 = scmp.lt.s32.totalorder %s300, 2
        %s302 = scalar_select %p301, %s300, 2
        %s303 = smul.u32 2, %s302
        %s304 = ssub.s32 5, %s303
        %p305 = scmp.lt.s32.totalorder %s304, 2
        %s306 = scalar_select %p305, %s304, 2
        %s307 = smul.u32 8, %s306
        %p308 = scmp.lt.s32.totalorder %s303, 4
        %s309 = scalar_select %p308, %s303, 4
        %s310 = smul.addr %s309, 8
        %s311 = scalar_lea.vmem %s0, %s310
        %p312 = pneg %p60
        %p313 = pneg %p57
        %s314 = sand.u32 %s81, 1
        %s315 = scalar_lea.sflag [#allocation3], %s314
        %s316 = sand.u32 %s81, 1
        %s317 = smul.addr %s316, 16
        %s318 = scalar_lea.vmem [#allocation2], %s317
        %p319 = pneg %p94
        %p320 = pneg %p91
        %s321 = smul.u32 %s23, 2
        %s322 = sadd.s32 %s321, %s24
        %p323 = scmp.lt.s32.totalorder %s322, 2
        %s324 = scalar_select %p323, %s322, 2
        %s325 = smul.u32 2, %s324
        %s326 = ssub.s32 5, %s325
        %p327 = scmp.lt.s32.totalorder %s326, 2
        %s328 = scalar_select %p327, %s326, 2
        %s329 = smul.u32 8, %s328
        %p330 = scmp.lt.s32.totalorder %s325, 4
        %s331 = scalar_select %p330, %s325, 4
        %s332 = smul.addr %s331, 8
        %s333 = scalar_lea.vmem %s2, %s332
        %p334 = pneg %p128
        %p335 = pneg %p125
        %p336 = pneg %p154
        %p337 = pneg %p151
        %s338 = smul.u32 2, %s23
        %p339 = scmp.lt.s32.totalorder %s338, 3
        %s340 = scalar_select %p339, %s338, 3
        %s341 = smul.addr %s340, 8
        %s342 = scalar_lea.vmem %s3, %s341
        %p343 = pneg %p180
        %p344 = pneg %p177
        %s345 = smul.u32 2, %s23
        %p346 = scmp.lt.s32.totalorder %s345, 3
        %s347 = scalar_select %p346, %s345, 3
        %s348 = smul.addr %s347, 8
        %s349 = scalar_lea.vmem %s4, %s348
        %s350 = smul.u32 %s23, 2
        %s351 = sadd.s32 %s350, %s24
        %p352 = scmp.lt.s32.totalorder %s351, 2
        %s353 = scalar_select %p352, %s351, 2
        %s354 = smul.u32 2, %s353
        %s355 = ssub.s32 5, %s354
        %p356 = scmp.lt.s32.totalorder %s355, 2
        %s357 = scalar_select %p356, %s355, 2
        %s358 = smul.u32 8, %s357
        %p359 = scmp.lt.s32.totalorder %s354, 4
        %s360 = scalar_select %p359, %s354, 4
        %s361 = smul.addr %s360, 8
        %s362 = scalar_lea.vmem %s0, %s361
        %s363 = smul.u32 %s23, 2
        %s364 = sadd.s32 %s363, %s24
        %p365 = scmp.lt.s32.totalorder %s364, 2
        %s366 = scalar_select %p365, %s364, 2
        %s367 = smul.u32 2, %s366
        %s368 = ssub.s32 5, %s367
        %p369 = scmp.lt.s32.totalorder %s368, 2
        %s370 = scalar_select %p369, %s368, 2
        %s371 = smul.u32 8, %s370
        %s372 = smul.u32 %s23, 2
        %s373 = sadd.s32 %s372, %s24
        %p374 = scmp.lt.s32.totalorder %s373, 2
        %s375 = scalar_select %p374, %s373, 2
        %s376 = smul.u32 2, %s375
        %s377 = ssub.s32 5, %s376
        %p378 = scmp.lt.s32.totalorder %s377, 2
        %s379 = scalar_select %p378, %s377, 2
        %s380 = smul.u32 8, %s379
        %s381 = smul.u32 %s23, 2
        %s382 = sadd.s32 %s381, %s24
        %p383 = scmp.lt.s32.totalorder %s382, 2
        %s384 = scalar_select %p383, %s382, 2
        %s385 = smul.u32 2, %s384
        %s386 = ssub.s32 5, %s385
        %p387 = scmp.lt.s32.totalorder %s386, 2
        %s388 = scalar_select %p387, %s386, 2
        %s389 = smul.u32 8, %s388
        %p390 = scmp.lt.s32.totalorder %s385, 4
        %s391 = scalar_select %p390, %s385, 4
        %s392 = smul.addr %s391, 8
        %s393 = scalar_lea.vmem %s2, %s392
        %s394 = smul.u32 %s23, 2
        %s395 = sadd.s32 %s394, %s24
        %p396 = scmp.lt.s32.totalorder %s395, 2
        %s397 = scalar_select %p396, %s395, 2
        %s398 = smul.u32 2, %s397
        %s399 = ssub.s32 5, %s398
        %p400 = scmp.lt.s32.totalorder %s399, 2
        %s401 = scalar_select %p400, %s399, 2
        %s402 = smul.u32 8, %s401
        %s403 = smul.u32 2, %s23
        %p404 = scmp.lt.s32.totalorder %s403, 3
        %s405 = scalar_select %p404, %s403, 3
        %s406 = smul.addr %s405, 8
        %s407 = scalar_lea.vmem %s3, %s406
        %s408 = smul.u32 2, %s23
        %s409 = smul.u32 2, %s23
        %p410 = scmp.lt.s32.totalorder %s409, 3
        %s411 = scalar_select %p410, %s409, 3
        %s412 = smul.addr %s411, 8
        %s413 = scalar_lea.vmem %s4, %s412
        %s414 = smul.u32 2, %s23
        %p415 = scmp.eq.s32.totalorder %s24, 0
        // Predicated region
        $region37: #{tpu_custom_call.1} parent=31 // pred_check
          %p416 = pneg %p415
        $region38: #{tpu_custom_call.1} parent=31 // pred_check_branch
          %418 = sbr.rel (%p416) target = $region40
        $region39: #{tpu_custom_call.1} parent=31 // pred_region
          %vm419 = vcmask 7168
          %420 = vst.msk [vmem:[%s407] sm:$0xff] %vm419, 0.0
          %421 = vst.msk [vmem:[%s407 + $0x8] sm:$0xff] %vm419, 0.0
          %422 = vst.msk [vmem:[%s413] sm:$0xff] %vm419, 0.0
          %423 = vst.msk [vmem:[%s413 + $0x8] sm:$0xff] %vm419, 0.0
        $region40: #{tpu_custom_call.1} parent=31 // pred_fallthru
          _
        %v424 = vld [vmem:[%s362] sm:$0xff]
        %v425 = vld [vmem:[%s362 + $0x8] sm:$0xff]
        %v426 = vld [vmem:[%s293] sm:$0xff]
        %v427 = vld [vmem:[%s293 + $0x8] sm:$0xff]
        %v428 = vlog2.pop %v426
        %v429 = vmul.f32 %v428, 0.6931472
        %v430 = vlog2.pop %v427
        %v431 = vmul.f32 %v430, 0.6931472
        %432 = vmax.xlane.f32.xlu0 %v424
        %v433 = vpop.xlane.xlu0 %432
        %434 = vmax.xlane.f32.xlu0 %v425
        %v435 = vpop.xlane.xlu0 %434
        %v436 = vsub.f32 %v424, %v433
        %v437 = vsub.f32 %v425, %v435
        %v438 = vmul.f32 %v436, 1.442695
        %v439 = vpow.pop %v438
        %v440 = vmul.f32 %v437, 1.442695
        %v441 = vpow.pop %v440
        %442 = vadd.xlane.f32.xlu0 %v439
        %v443 = vpop.xlane.xlu0 %442
        %444 = vadd.xlane.f32.xlu0 %v441
        %v445 = vpop.xlane.xlu0 %444
        %v446 = vlog2.pop %v443
        %v447 = vmul.f32 %v446, 0.6931472
        %v448 = vlog2.pop %v445
        %v449 = vmul.f32 %v448, 0.6931472
        %v450 = vlaneseq
        %v451 = vand.u32 %v450, 127
        %v452 = vld [vmem:[%s393] sm:$0xff]
        %v453 = vld [vmem:[%s393 + $0x8] sm:$0xff]
        %454 = vset.pattern.permute.xlu0 0
        %455 = vperm.xlu0 %454, %v452
        %v456 = vpop.permute.xlu0 %455
        %457 = vset.pattern.permute.xlu0 0
        %458 = vperm.xlu0 %457, %v453
        %v459 = vpop.permute.xlu0 %458
        %vm460 = vcmp.eq.s32.totalorder %v451, %v456
        %vm461 = vcmp.eq.s32.totalorder %v451, %v459
        %v462 = vsel %vm460, %v436, 0.0
        %v463 = vsel %vm461, %v437, 0.0
        %464 = vadd.xlane.f32.xlu0 %v462
        %v465 = vpop.xlane.xlu0 %464
        %466 = vadd.xlane.f32.xlu0 %v463
        %v467 = vpop.xlane.xlu0 %466
        %v468 = vsub.f32 %v447, %v465
        %v469 = vsub.f32 %v449, %v467
        %v470 = vsub.f32 %v436, %v429
        %v471 = vsub.f32 %v437, %v431
        %v472 = vmul.f32 %v439, %v470
        %v473 = vmul.f32 %v441, %v471
        %474 = vadd.xlane.f32.xlu0 %v472
        %v475 = vpop.xlane.xlu0 %474
        %476 = vadd.xlane.f32.xlu0 %v473
        %v477 = vpop.xlane.xlu0 %476
        %v478 = vmul.f32 %v443, %v447
        %v479 = vmul.f32 %v445, %v449
        %v480 = vsub.f32 %v475, %v478
        %v481 = vsub.f32 %v477, %v479
        %v482 = vrcp.pop %v443
        %v483 = vmul.f32 %v443, %v482
        %v484 = vsub.f32 1.0, %v483
        %v485 = vmul.f32 %v482, %v484
        %v486 = vadd.f32 %v482, %v485
        %vm487 = vweird.f32 %v443
        %vm488 = vweird.f32 %v482
        %vm489 = vmor %vm487, %vm488
        %v490 = vsel %vm489, %v482, %v486
        %v491 = vand.u32 2147483647, %v443
        %vm492 = vcmp.eq.f32.partialorder %v491, 8.507059e+37
        %v493 = vand.u32 %v443, 2147483648
        %v494 = vor.u32 1.1754944e-38, %v493
        %v495 = vsel %vm492, %v494, %v490
        %v496 = vrcp.pop %v445
        %v497 = vmul.f32 %v445, %v496
        %v498 = vsub.f32 1.0, %v497
        %v499 = vmul.f32 %v496, %v498
        %v500 = vadd.f32 %v496, %v499
        %vm501 = vweird.f32 %v445
        %vm502 = vweird.f32 %v496
        %vm503 = vmor %vm501, %vm502
        %v504 = vsel %vm503, %v496, %v500
        %v505 = vand.u32 2147483647, %v445
        %vm506 = vcmp.eq.f32.partialorder %v505, 8.507059e+37
        %v507 = vand.u32 %v445, 2147483648
        %v508 = vor.u32 1.1754944e-38, %v507
        %v509 = vsel %vm506, %v508, %v504
        %v510 = vmul.f32 %v480, %v495
        %v511 = vmul.f32 %v481, %v509
        %s512 = smul.u32 %s23, 2
        %s513 = sadd.s32 %s512, %s24
        %s514 = smul.u32 %s513, 16
        %v515 = vlaneseq
        %v516 = vshrl.u32 %v515, 7
        %v517 = vadd.s32 %v516, 8
        %v518 = vstv %s514
        %v519 = vadd.s32 %v518, %v516
        %v520 = vadd.s32 %v518, %v517
        %vm521 = vcmp.lt.s32.totalorder %v519, 40
        %vm522 = vcmp.lt.s32.totalorder %v520, 40
        %v523 = vld [vmem:[%s407] sm:$0xff]
        %v524 = vld [vmem:[%s407 + $0x8] sm:$0xff]
        %v525 = vsel %vm521, %v468, 0.0
        %v526 = vsel %vm522, %v469, 0.0
        %v527 = vadd.f32 %v523, %v525
        %v528 = vadd.f32 %v524, %v526
        %vm529 = vcmask 7168
        %530 = vst.msk [vmem:[%s407] sm:$0xff] %vm529, %v527
        %531 = vst.msk [vmem:[%s407 + $0x8] sm:$0xff] %vm529, %v528
        %v532 = vld [vmem:[%s413] sm:$0xff]
        %v533 = vld [vmem:[%s413 + $0x8] sm:$0xff]
        %v534 = vsel %vm521, %v510, 0.0
        %v535 = vsel %vm522, %v511, 0.0
        %v536 = vadd.f32 %v532, %v534
        %v537 = vadd.f32 %v533, %v535
        %538 = vst.msk [vmem:[%s413] sm:$0xff] %vm529, %v536
        %539 = vst.msk [vmem:[%s413 + $0x8] sm:$0xff] %vm529, %v537
        %s540 = smul.u32 2, %s23
        %p541 = scmp.lt.s32.totalorder %s540, 3
        %s542 = scalar_select %p541, %s540, 3
        %s543 = smul.addr %s542, 8
        %s544 = scalar_lea.vmem %s3, %s543
        %s545 = smul.u32 2, %s23
        %p546 = scmp.lt.s32.totalorder %s545, 3
        %s547 = scalar_select %p546, %s545, 3
        %s548 = smul.addr %s547, 8
        %s549 = scalar_lea.vmem %s4, %s548
        // Predicated region
        $region41: #{tpu_custom_call.1} parent=31 // pred_check
          %p550 = pneg %p151
        $region42: #{tpu_custom_call.1} parent=31 // pred_check_branch
          %552 = sbr.rel (%p550) target = $region44
        $region43: #{tpu_custom_call.1} parent=31 // pred_region
          %s553 = smul.u32 2, %s23
        $region44: #{tpu_custom_call.1} parent=31 // pred_fallthru
          _
        // Predicated region
        $region45: #{tpu_custom_call.1} parent=31 // pred_check
          %p554 = pneg %p177
        $region46: #{tpu_custom_call.1} parent=31 // pred_check_branch
          %556 = sbr.rel (%p554) target = $region48
        $region47: #{tpu_custom_call.1} parent=31 // pred_region
          %s557 = smul.u32 2, %s23
        $region48: #{tpu_custom_call.1} parent=31 // pred_fallthru
          _
      $region32: #{tpu_custom_call.1} parent=5 // pred_fallthru
        _
      %p558 = scmp.le.s32.totalorder 2, %s14
      // Predicated region
      $region49: #{tpu_custom_call.1} parent=5 // pred_check
        %p559 = pneg %p558
      $region50: #{tpu_custom_call.1} parent=5 // pred_check_branch
        %561 = sbr.rel (%p559) target = $region52
      $region51: #{tpu_custom_call.1} parent=5 // pred_region
        %s562 = ssub.s32 %s14, 2
        // Predicated region
        $region53: #{tpu_custom_call.1} parent=51 // pred_check
          %p563 = pneg %p157
        $region54: #{tpu_custom_call.1} parent=51 // pred_check_branch
          %565 = sbr.rel (%p563) target = $region56
        $region55: #{tpu_custom_call.1} parent=51 // pred_region
          %s566 = smul.u32 2, %s25
          %p567 = scmp.lt.s32.totalorder %s566, 3
          %s568 = scalar_select %p567, %s566, 3
          %s569 = smul.addr %s568, 8
          %s570 = scalar_lea.vmem %s3, %s569
        $region56: #{tpu_custom_call.1} parent=51 // pred_fallthru
          _
        // Predicated region
        $region57: #{tpu_custom_call.1} parent=51 // pred_check
          %p571 = pneg %p183
        $region58: #{tpu_custom_call.1} parent=51 // pred_check_branch
          %573 = sbr.rel (%p571) target = $region60
        $region59: #{tpu_custom_call.1} parent=51 // pred_region
          %s574 = smul.u32 2, %s25
          %p575 = scmp.lt.s32.totalorder %s574, 3
          %s576 = scalar_select %p575, %s574, 3
          %s577 = smul.addr %s576, 8
          %s578 = scalar_lea.vmem %s4, %s577
        $region60: #{tpu_custom_call.1} parent=51 // pred_fallthru
          _
      $region52: #{tpu_custom_call.1} parent=5 // pred_fallthru
        _
    $region6: #{tpu_custom_call.1} parent=1 // loop_footer
      %s18 = sadd.s32 1, %s14
    $region7: #{tpu_custom_call.1} parent=1 // loop_footer_branch
      %13 = sbr.rel target = $region3
    $region8: #{tpu_custom_call.1} parent=1 // loop_exit
      _
    %579 = vsyncpa [#allocation3], 1
    %s580 = scalar_lea.sflag [#allocation3], 1
    %581 = vsyncpa %s580, 1

</llo_original>
